<compile_context>
chip_gen: v7x
topology: tpu7x:2x2x1
jax: 0.10.0
libtpu: 0.0.40
codegen_flags: <defaults>
</compile_context>

<pallas_src>
import math

import jax
import jax.numpy as jnp
from jax.experimental import pallas as pl
from jax.experimental.pallas import tpu as pltpu

_K_ALIGN = 16  # bf16 sublane packing height; also a multiple of the f32 8.


def _round_up(x, m):
    return (x + m - 1) // m * m


def _lstm_cell_kernel(xh_ref, w_ref, cx_ref, hy_ref, cy_ref):
    """One gate-axis tile: gates = xh @ W_tile (bias folded in), LSTM update.

    Shapes seen by the kernel (tn = hidden tile width):
      xh_ref : (B, K_pad)      packed [x | hx | 1 | 0...], bf16
      w_ref  : (K_pad, 4*tn)   contiguous bf16 slab, column order [i|f|g|o]
      cx_ref : (B, tn)         f32
      hy_ref, cy_ref : (B, tn)
    """
    # Single fused MXU pass, f32 accumulation; the bias rides in through the
    # all-ones xh column -> no bias input stream, no broadcast add.
    gates = jnp.dot(xh_ref[...], w_ref[...], preferred_element_type=jnp.float32)

    tn = hy_ref.shape[-1]

    def _sigmoid(v):
        # One EUP push (tanh) instead of exp + reciprocal.
        return 0.5 * jnp.tanh(0.5 * v) + 0.5

    ingate = _sigmoid(gates[:, 0 * tn:1 * tn])
    forgetgate = _sigmoid(gates[:, 1 * tn:2 * tn])
    cellgate = jnp.tanh(gates[:, 2 * tn:3 * tn])
    outgate = _sigmoid(gates[:, 3 * tn:4 * tn])

    cx = cx_ref[...].astype(jnp.float32)
    cy = cx * forgetgate + ingate * cellgate
    hy = outgate * jnp.tanh(cy)

    cy_ref[...] = cy.astype(cy_ref.dtype)
    hy_ref[...] = hy.astype(hy_ref.dtype)


def choose_tile_n(input_size, hidden_size, weight_bytes=2,
                  max_tile_weight_bytes=16 * 1024 * 1024):
    """Largest hidden tile whose double-buffered weight slab stays inside a
    v7x-safe VMEM budget.  For small/medium H this returns H (nt=1): per-step
    grid overhead dominates, so fewer/fatter steps win on an HBM-bound kernel.
    When tiling kicks in (H of several K), tile_n stays a multiple of 128 so
    hy/cy stores remain unmasked full-lane vst.  (v7x note: once nt > 1,
    prefer nt >= 4 so each of the two TensorCores still pipelines >= 2 DMAs.)
    """
    k_pad = _round_up(input_size + hidden_size + 1, _K_ALIGN)
    tile_n = hidden_size
    while (k_pad * 4 * tile_n * weight_bytes > max_tile_weight_bytes
           and tile_n % 2 == 0 and (tile_n // 2) % 128 == 0):
        tile_n //= 2
    return tile_n


def prepare_lstm_params(w_x2h, w_h2h, b_x2h, b_h2h, tile_n,
                        weight_dtype=jnp.bfloat16):
    """One-time parameter prep (all prep-time work, nothing per step).

      w_x2h : (4H, D_IN)  torch nn.Linear layout
      w_h2h : (4H, H)
      b_x2h, b_h2h : (4H,)

    Returns w_tiled of shape (nt, K_pad, 4*tile_n) in `weight_dtype`, where
      * K_pad = round_up(D_IN + H + 1, 16): rows are [Wx; Wh; bx+bh; 0...] so
        the bias is applied by an all-ones column in xh (bias precision is the
        weight dtype; biases are zero after the module's reset_parameters()),
      * columns of tile j are [i_j | f_j | g_j | o_j] for hidden slice
        [j*tile_n, (j+1)*tile_n)  (gate order matches torch.chunk(., 4, 1)),
      * each tile is a contiguous slab -> one dense DMA per grid step.
    """
    four_h, d_in = w_x2h.shape
    H = four_h // 4
    assert w_h2h.shape == (4 * H, H)
    assert H % tile_n == 0
    nt = H // tile_n
    k_act = d_in + H
    k_pad = _round_up(k_act + 1, _K_ALIGN)

    w = jnp.concatenate([w_x2h.T, w_h2h.T], axis=0)             # (K_act, 4H)
    b = (b_x2h + b_h2h).reshape(1, 4 * H)
    pad = jnp.zeros((k_pad - k_act - 1, 4 * H), w.dtype)
    w = jnp.concatenate([w, b, pad], axis=0)                    # (K_pad, 4H)

    # gate-major [i|f|g|o] columns -> tile-major: tile j = [i_j|f_j|g_j|o_j]
    w = w.reshape(k_pad, 4, nt, tile_n).transpose(0, 2, 1, 3).reshape(k_pad, 4 * H)
    # pre-tiled contiguous slabs: (nt, K_pad, 4*tile_n)
    w = w.reshape(k_pad, nt, 4 * tile_n).transpose(1, 0, 2)
    return w.astype(weight_dtype)


@jax.jit
def lstm_cell_pallas(x, hx, cx, w_tiled):
    """Single-step LSTM cell; gate/hidden axis is a 1-D 'parallel' grid that
    collapses to a single step (nt=1) for small/medium H."""
    B, d_in = x.shape
    H = hx.shape[1]
    nt, k_pad, four_tn = w_tiled.shape
    tile_n = four_tn // 4
    assert nt * tile_n == H
    assert k_pad >= d_in + H + 1

    # Packed + padded activations [x | hx | 1 | 0...]; the ones column applies
    # the folded bias.  Cheap layout plumbing at B=8.
    # TODO(synk): at large B or in the fused-sequence version, pass x/hx as
    # separate inputs (two dots into the same f32 gates) instead of this concat,
    # and alias the carried state via input_output_aliases.
    parts = [x, hx, jnp.ones((B, 1), x.dtype)]
    if k_pad > d_in + H + 1:
        parts.append(jnp.zeros((B, k_pad - d_in - H - 1), x.dtype))
    xh = jnp.concatenate(parts, axis=1).astype(w_tiled.dtype)    # (B, K_pad) bf16

    # VMEM budget from the actual double-buffered working set, with headroom,
    # capped below v7x's 64 MiB physical VMEM (v5e/v6e: 128 MiB physical).
    w_tile_bytes = k_pad * four_tn * w_tiled.dtype.itemsize
    act_bytes = B * k_pad * xh.dtype.itemsize
    io_bytes = 3 * B * tile_n * 4                                # cx in, hy/cy out (f32)
    need = 2 * (w_tile_bytes + act_bytes + io_bytes)             # 2x: double-buffering
    vmem_limit = int(min(48 * 1024 * 1024, max(2 * need, 16 * 1024 * 1024)))

    out_shapes = (
        jax.ShapeDtypeStruct((B, H), x.dtype),                   # hy
        jax.ShapeDtypeStruct((B, H), x.dtype),                   # cy
    )

    hy, cy = pl.pallas_call(
        _lstm_cell_kernel,
        out_shape=out_shapes,
        grid_spec=pltpu.PrefetchScalarGridSpec(
            num_scalar_prefetch=0,
            grid=(nt,),
            in_specs=[
                pl.BlockSpec((B, k_pad), lambda j: (0, 0)),                 # xh (full)
                pl.BlockSpec((pl.Squeezed(), k_pad, four_tn),
                             lambda j: (j, 0, 0)),                          # weight slab
                pl.BlockSpec((B, tile_n), lambda j: (0, j)),                # cx tile
            ],
            out_specs=(
                pl.BlockSpec((B, tile_n), lambda j: (0, j)),                # hy tile
                pl.BlockSpec((B, tile_n), lambda j: (0, j)),                # cy tile
            ),
        ),
        compiler_params=pltpu.CompilerParams(
            # Gate tiles are independent -> shard across v7x's 2 TensorCores
            # whenever nt > 1 (nt == 1 for small/medium H).
            dimension_semantics=("parallel",),
            vmem_limit_bytes=vmem_limit,
        ),
    )(xh, w_tiled, cx)
    return hy, cy


def _reference_lstm_cell(x, hx, cx, w_x2h, w_h2h, b_x2h, b_h2h):
    """Pure-JAX f32 reference in the original (torch) parameter layout."""
    gates = x @ w_x2h.T + hx @ w_h2h.T + b_x2h + b_h2h
    H = hx.shape[1]
    i = jax.nn.sigmoid(gates[:, 0 * H:1 * H])
    f = jax.nn.sigmoid(gates[:, 1 * H:2 * H])
    g = jnp.tanh(gates[:, 2 * H:3 * H])
    o = jax.nn.sigmoid(gates[:, 3 * H:4 * H])
    cy = cx * f + i * g
    hy = o * jnp.tanh(cy)
    return hy, cy


if __name__ == "__main__":
    # Small but lane/sublane-friendly: B = 8, H = 256 (multiple of 128 ->
    # lane-aligned gate slices and unmasked full-lane hy/cy stores).
    B, D_IN, H = 8, 16, 256
    std = 1.0 / math.sqrt(H)

    key = jax.random.PRNGKey(0)
    k_x, k_hx, k_cx, k_wx, k_wh = jax.random.split(key, 5)

    x = jax.random.normal(k_x, (B, D_IN), dtype=jnp.float32)
    hx = jax.random.normal(k_hx, (B, H), dtype=jnp.float32)
    cx = jax.random.normal(k_cx, (B, H), dtype=jnp.float32)

    # PyTorch nn.Linear layout: (out_features, in_features); biases zeroed by
    # reset_parameters().
    w_x2h = jax.random.uniform(k_wx, (4 * H, D_IN), minval=-std, maxval=std,
                               dtype=jnp.float32)
    w_h2h = jax.random.uniform(k_wh, (4 * H, H), minval=-std, maxval=std,
                               dtype=jnp.float32)
    b_x2h = jnp.zeros((4 * H,), dtype=jnp.float32)
    b_h2h = jnp.zeros((4 * H,), dtype=jnp.float32)

    # One-time parameter folding: [Wx; Wh; b] packed, bf16, tile-major, pre-tiled.
    TILE_N = choose_tile_n(D_IN, H)            # == H here -> nt = 1, single step
    w_tiled = prepare_lstm_params(w_x2h, w_h2h, b_x2h, b_h2h, TILE_N)

    hy, cy = lstm_cell_pallas(x, hx, cx, w_tiled)
    jax.block_until_ready((hy, cy))

    hy_ref, cy_ref = _reference_lstm_cell(x, hx, cx, w_x2h, w_h2h, b_x2h, b_h2h)
    # Tolerance deliberately relaxed for bf16 weights/activations (all gate and
    # cell math stays f32); observed error is ~1e-3, 2e-2 gives ample margin.
    assert jnp.allclose(hy, hy_ref, atol=2e-2, rtol=2e-2), "hy mismatch"
    assert jnp.allclose(cy, cy_ref, atol=2e-2, rtol=2e-2), "cy mismatch"

    print("KERNEL_OK")
</pallas_src>

<mosaic_0001>
module attributes {stable_mosaic.version = 11 : i64} {
  func.func @_lstm_cell_kernel(%arg0: i32, %arg1: memref<8x288xbf16, #tpu.memory_space<vmem>>, %arg2: memref<1x288x1024xbf16, #tpu.memory_space<vmem>>, %arg3: memref<8x256xf32, #tpu.memory_space<vmem>>, %arg4: memref<8x256xf32, #tpu.memory_space<vmem>>, %arg5: memref<8x256xf32, #tpu.memory_space<vmem>>) attributes {dimension_semantics = [#tpu.dimension_semantics<parallel>], iteration_bounds = array<i64: 1>, scalar_prefetch = 0 : i64, scratch_operands = 0 : i64, tpu.core_type = #tpu.core_type<tc>, window_params = [{pipeline_mode = #tpu.pipeline_mode<synchronous>, transform_indices = @transform_0, window_bounds = array<i64: 8, 288>}, {transform_indices = @transform_1, window_bounds = array<i64: 1, 288, 1024>}, {transform_indices = @transform_2, window_bounds = array<i64: 8, 256>}, {transform_indices = @transform_3, window_bounds = array<i64: 8, 256>}, {transform_indices = @transform_4, window_bounds = array<i64: 8, 256>}]} {
    %c0 = arith.constant 0 : index
    %c0_0 = arith.constant 0 : index
    %0 = vector.load %arg1[%c0, %c0_0] : memref<8x288xbf16, #tpu.memory_space<vmem>>, vector<8x288xbf16>
    %c0_1 = arith.constant 0 : index
    %c0_2 = arith.constant 0 : index
    %c0_3 = arith.constant 0 : index
    %1 = vector.load %arg2[%c0_1, %c0_2, %c0_3] : memref<1x288x1024xbf16, #tpu.memory_space<vmem>>, vector<1x288x1024xbf16>
    %2 = vector.shape_cast %1 : vector<1x288x1024xbf16> to vector<288x1024xbf16>
    %cst = arith.constant dense<0.000000e+00> : vector<8x1024xf32>
    %3 = tpu.matmul %0, %2, %cst {dimension_numbers = #tpu.dot_dimension_numbers<[1], [0], [0], [1], [0, 0, 1, 1], [], []>} : vector<8x288xbf16>, vector<288x1024xbf16>, vector<8x1024xf32> -> vector<8x1024xf32>
    %4 = vector.extract_strided_slice %3 {offsets = [0, 0], sizes = [8, 256], strides = [1, 1]} : vector<8x1024xf32> to vector<8x256xf32>
    %cst_4 = arith.constant 5.000000e-01 : f32
    %5 = vector.broadcast %cst_4 : f32 to vector<8x256xf32>
    %6 = arith.mulf %5, %4 : vector<8x256xf32>
    %7 = math.tanh %6 : vector<8x256xf32>
    %cst_5 = arith.constant 5.000000e-01 : f32
    %8 = vector.broadcast %cst_5 : f32 to vector<8x256xf32>
    %9 = arith.mulf %8, %7 : vector<8x256xf32>
    %cst_6 = arith.constant 5.000000e-01 : f32
    %10 = vector.broadcast %cst_6 : f32 to vector<8x256xf32>
    %11 = arith.addf %9, %10 : vector<8x256xf32>
    %12 = vector.extract_strided_slice %3 {offsets = [0, 256], sizes = [8, 256], strides = [1, 1]} : vector<8x1024xf32> to vector<8x256xf32>
    %cst_7 = arith.constant 5.000000e-01 : f32
    %13 = vector.broadcast %cst_7 : f32 to vector<8x256xf32>
    %14 = arith.mulf %13, %12 : vector<8x256xf32>
    %15 = math.tanh %14 : vector<8x256xf32>
    %cst_8 = arith.constant 5.000000e-01 : f32
    %16 = vector.broadcast %cst_8 : f32 to vector<8x256xf32>
    %17 = arith.mulf %16, %15 : vector<8x256xf32>
    %cst_9 = arith.constant 5.000000e-01 : f32
    %18 = vector.broadcast %cst_9 : f32 to vector<8x256xf32>
    %19 = arith.addf %17, %18 : vector<8x256xf32>
    %20 = vector.extract_strided_slice %3 {offsets = [0, 512], sizes = [8, 256], strides = [1, 1]} : vector<8x1024xf32> to vector<8x256xf32>
    %21 = math.tanh %20 : vector<8x256xf32>
    %22 = vector.extract_strided_slice %3 {offsets = [0, 768], sizes = [8, 256], strides = [1, 1]} : vector<8x1024xf32> to vector<8x256xf32>
    %cst_10 = arith.constant 5.000000e-01 : f32
    %23 = vector.broadcast %cst_10 : f32 to vector<8x256xf32>
    %24 = arith.mulf %23, %22 : vector<8x256xf32>
    %25 = math.tanh %24 : vector<8x256xf32>
    %cst_11 = arith.constant 5.000000e-01 : f32
    %26 = vector.broadcast %cst_11 : f32 to vector<8x256xf32>
    %27 = arith.mulf %26, %25 : vector<8x256xf32>
    %cst_12 = arith.constant 5.000000e-01 : f32
    %28 = vector.broadcast %cst_12 : f32 to vector<8x256xf32>
    %29 = arith.addf %27, %28 : vector<8x256xf32>
    %c0_13 = arith.constant 0 : index
    %c0_14 = arith.constant 0 : index
    %30 = vector.load %arg3[%c0_13, %c0_14] : memref<8x256xf32, #tpu.memory_space<vmem>>, vector<8x256xf32>
    %31 = arith.mulf %30, %19 : vector<8x256xf32>
    %32 = arith.mulf %11, %21 : vector<8x256xf32>
    %33 = arith.addf %31, %32 : vector<8x256xf32>
    %34 = math.tanh %33 : vector<8x256xf32>
    %35 = arith.mulf %29, %34 : vector<8x256xf32>
    %c0_15 = arith.constant 0 : index
    %c0_16 = arith.constant 0 : index
    %36 = vector.load %arg5[%c0_15, %c0_16] : memref<8x256xf32, #tpu.memory_space<vmem>>, vector<8x256xf32>
    tpu.vector_store %arg5[%c0_15, %c0_16], %33 {strides = array<i32>} : memref<8x256xf32, #tpu.memory_space<vmem>>, vector<8x256xf32>,
    %c0_17 = arith.constant 0 : index
    %c0_18 = arith.constant 0 : index
    %37 = vector.load %arg4[%c0_17, %c0_18] : memref<8x256xf32, #tpu.memory_space<vmem>>, vector<8x256xf32>
    tpu.vector_store %arg4[%c0_17, %c0_18], %35 {strides = array<i32>} : memref<8x256xf32, #tpu.memory_space<vmem>>, vector<8x256xf32>,
    return
  }
  func.func @transform_0(%arg0: i32) -> (i32, i32) {
    %c0_i32 = arith.constant 0 : i32
    %c0_i32_0 = arith.constant 0 : i32
    %c0_i32_1 = arith.constant 0 : i32
    return %c0_i32, %c0_i32_0 : i32, i32
  }
  func.func @transform_1(%arg0: i32) -> (i32, i32, i32) {
    %c0_i32 = arith.constant 0 : i32
    %c0_i32_0 = arith.constant 0 : i32
    %c0_i32_1 = arith.constant 0 : i32
    return %arg0, %c0_i32, %c0_i32_0 : i32, i32, i32
  }
  func.func @transform_2(%arg0: i32) -> (i32, i32) {
    %c0_i32 = arith.constant 0 : i32
    %c0_i32_0 = arith.constant 0 : i32
    return %c0_i32, %arg0 : i32, i32
  }
  func.func @transform_3(%arg0: i32) -> (i32, i32) {
    %c0_i32 = arith.constant 0 : i32
    %c0_i32_0 = arith.constant 0 : i32
    return %c0_i32, %arg0 : i32, i32
  }
  func.func @transform_4(%arg0: i32) -> (i32, i32) {
    %c0_i32 = arith.constant 0 : i32
    %c0_i32_0 = arith.constant 0 : i32
    return %c0_i32, %arg0 : i32, i32
  }
}

</mosaic_0001>

<llo_original>
// kernel: lstm_cell_pallas.1
$region0: #{lstm_cell_pallas.1}
  #allocation0 [shape = 'u32[]', space=smem, size = 0x4, offset = 0x4, fixed_abs, tag = 'smem constant byte address 0x4 - core index']
  #allocation1 [shape = 'u32[144,128]{1,0:T(1,128)}', space=vmem, size = 0x12000, scoped, tag = 'internal scratch']
  %s0 = inlined_call_operand.vmem [shape: bf16[8,288], index: 0, kind: input, shape index: {}]
  %s1 = inlined_call_operand.hbm [shape: bf16[1,288,1024], index: 1, kind: input, shape index: {}]
  %s2 = inlined_call_operand.vmem [shape: f32[8,256], index: 2, kind: input, shape index: {}]
  %s3 = inlined_call_operand.hbm [shape: f32[8,256], index: 3, kind: output, shape index: {0}]
  %s4 = inlined_call_operand.hbm [shape: f32[8,256], index: 4, kind: output, shape index: {1}]
  %5 = xla_tuple %s3, %s4
  %s6 = sld [smem:[#allocation0]]
  $region34: #{lstm_cell_pallas.1} parent=0
    _
  %s8 = ssub.s32 1, %s6
  %s9 = scalar_select 0, %s8, %s6
  $region1: #{lstm_cell_pallas.1} parent=0
    #allocation2 [shape = 'u8[589824]{0}', space=vmem, size = 0x90000, scoped, tag = 'input window, operand 1, single buffered']
    #allocation3 [shape = 's32[1]{0}', space=sflag, size = 0x4, scoped, tag = 'scoped memory for lstm_cell_pallas.1']
    #allocation4 [shape = 's32[1]{0}', space=sflag, size = 0x4, scoped, tag = 'scoped memory for lstm_cell_pallas.1']
    #allocation5 [shape = 'u8[8192]{0}', space=vmem, size = 0x2000, scoped, tag = 'output window, operand 0, single buffered']
    #allocation6 [shape = 'u8[8192]{0}', space=vmem, size = 0x2000, scoped, tag = 'output window, operand 1, single buffered']
    #allocation7 [shape = 's32[1]{0}', space=sflag, size = 0x4, scoped, tag = 'scoped memory for lstm_cell_pallas.1']
    %10 = vsyncpa [#allocation3], 0
    %11 = vsyncpa [#allocation4], 0
    %12 = vsyncpa [#allocation7], 0
    // Predicated region
    $region2: #{lstm_cell_pallas.1} parent=1 // pred_check
      _
    $region3: #{lstm_cell_pallas.1} parent=1 // pred_check_branch
      %14 = sbr.rel (0) target = $region5
    $region4: #{lstm_cell_pallas.1} parent=1 // pred_region
      _
    $region5: #{lstm_cell_pallas.1} parent=1 // pred_fallthru
      _
    // Predicated region
    $region6: #{lstm_cell_pallas.1} parent=1 // pred_check
      _
    $region7: #{lstm_cell_pallas.1} parent=1 // pred_check_branch
      %16 = sbr.rel (0) target = $region9
    $region8: #{lstm_cell_pallas.1} parent=1 // pred_region
      %s18 = ssub.s32 18432, 18432
      %19 = vsyncadd [#allocation3], %s18
      %s20 = sshll.u32 [#allocation2], 4
      %s21 = int_to_ptr.vmem [resolvable:$true] %s20
      %26 = dma.hbm_to_vmem [thread:$0]  %s1, 18432, %s21, [#allocation3], 512, 512, 32
    $region9: #{lstm_cell_pallas.1} parent=1 // pred_fallthru
      _
    // Predicated region
    $region10: #{lstm_cell_pallas.1} parent=1 // pred_check
      _
    $region11: #{lstm_cell_pallas.1} parent=1 // pred_check_branch
      %28 = sbr.rel (0) target = $region13
    $region12: #{lstm_cell_pallas.1} parent=1 // pred_region
      _
    $region13: #{lstm_cell_pallas.1} parent=1 // pred_fallthru
      _
    // Predicated region
    $region14: #{lstm_cell_pallas.1} parent=1 // pred_check
      _
    $region15: #{lstm_cell_pallas.1} parent=1 // pred_check_branch
      %30 = sbr.rel (0) target = $region17
    $region16: #{lstm_cell_pallas.1} parent=1 // pred_region
      %31 = dma.done [#allocation3], 18432
    $region17: #{lstm_cell_pallas.1} parent=1 // pred_fallthru
      _
    %v33 = vld [vmem:[%s0] sm:$0xff]
    %v34 = vld [vmem:[%s0 + $0x8] sm:$0xf]
    %v35 = vld [vmem:[#allocation2] sm:$0xff]
    %v36 = vld [vmem:[#allocation2 + $0x8] sm:$0xff]
    %v37 = vld [vmem:[#allocation2 + $0x10] sm:$0xff]
    %v38 = vld [vmem:[#allocation2 + $0x18] sm:$0xff]
    %v39 = vld [vmem:[#allocation2 + $0x20] sm:$0xff]
    %v40 = vld [vmem:[#allocation2 + $0x28] sm:$0xff]
    %v41 = vld [vmem:[#allocation2 + $0x30] sm:$0xff]
    %v42 = vld [vmem:[#allocation2 + $0x38] sm:$0xff]
    %v43 = vld [vmem:[#allocation2 + $0x40] sm:$0xff]
    %v44 = vld [vmem:[#allocation2 + $0x48] sm:$0xff]
    %v45 = vld [vmem:[#allocation2 + $0x50] sm:$0xff]
    %v46 = vld [vmem:[#allocation2 + $0x58] sm:$0xff]
    %v47 = vld [vmem:[#allocation2 + $0x60] sm:$0xff]
    %v48 = vld [vmem:[#allocation2 + $0x68] sm:$0xff]
    %v49 = vld [vmem:[#allocation2 + $0x70] sm:$0xff]
    %v50 = vld [vmem:[#allocation2 + $0x78] sm:$0xff]
    %v51 = vld [vmem:[#allocation2 + $0x80] sm:$0xff]
    %v52 = vld [vmem:[#allocation2 + $0x88] sm:$0xff]
    %v53 = vld [vmem:[#allocation2 + $0x90] sm:$0xff]
    %v54 = vld [vmem:[#allocation2 + $0x98] sm:$0xff]
    %v55 = vld [vmem:[#allocation2 + $0xa0] sm:$0xff]
    %v56 = vld [vmem:[#allocation2 + $0xa8] sm:$0xff]
    %v57 = vld [vmem:[#allocation2 + $0xb0] sm:$0xff]
    %v58 = vld [vmem:[#allocation2 + $0xb8] sm:$0xff]
    %v59 = vld [vmem:[#allocation2 + $0xc0] sm:$0xff]
    %v60 = vld [vmem:[#allocation2 + $0xc8] sm:$0xff]
    %v61 = vld [vmem:[#allocation2 + $0xd0] sm:$0xff]
    %v62 = vld [vmem:[#allocation2 + $0xd8] sm:$0xff]
    %v63 = vld [vmem:[#allocation2 + $0xe0] sm:$0xff]
    %v64 = vld [vmem:[#allocation2 + $0xe8] sm:$0xff]
    %v65 = vld [vmem:[#allocation2 + $0xf0] sm:$0xff]
    %v66 = vld [vmem:[#allocation2 + $0xf8] sm:$0xff]
    %v67 = vld [vmem:[#allocation2 + $0x100] sm:$0xff]
    %v68 = vld [vmem:[#allocation2 + $0x108] sm:$0xff]
    %v69 = vld [vmem:[#allocation2 + $0x110] sm:$0xff]
    %v70 = vld [vmem:[#allocation2 + $0x118] sm:$0xff]
    %v71 = vld [vmem:[#allocation2 + $0x120] sm:$0xff]
    %v72 = vld [vmem:[#allocation2 + $0x128] sm:$0xff]
    %v73 = vld [vmem:[#allocation2 + $0x130] sm:$0xff]
    %v74 = vld [vmem:[#allocation2 + $0x138] sm:$0xff]
    %v75 = vld [vmem:[#allocation2 + $0x140] sm:$0xff]
    %v76 = vld [vmem:[#allocation2 + $0x148] sm:$0xff]
    %v77 = vld [vmem:[#allocation2 + $0x150] sm:$0xff]
    %v78 = vld [vmem:[#allocation2 + $0x158] sm:$0xff]
    %v79 = vld [vmem:[#allocation2 + $0x160] sm:$0xff]
    %v80 = vld [vmem:[#allocation2 + $0x168] sm:$0xff]
    %v81 = vld [vmem:[#allocation2 + $0x170] sm:$0xff]
    %v82 = vld [vmem:[#allocation2 + $0x178] sm:$0xff]
    %v83 = vld [vmem:[#allocation2 + $0x180] sm:$0xff]
    %v84 = vld [vmem:[#allocation2 + $0x188] sm:$0xff]
    %v85 = vld [vmem:[#allocation2 + $0x190] sm:$0xff]
    %v86 = vld [vmem:[#allocation2 + $0x198] sm:$0xff]
    %v87 = vld [vmem:[#allocation2 + $0x1a0] sm:$0xff]
    %v88 = vld [vmem:[#allocation2 + $0x1a8] sm:$0xff]
    %v89 = vld [vmem:[#allocation2 + $0x1b0] sm:$0xff]
    %v90 = vld [vmem:[#allocation2 + $0x1b8] sm:$0xff]
    %v91 = vld [vmem:[#allocation2 + $0x1c0] sm:$0xff]
    %v92 = vld [vmem:[#allocation2 + $0x1c8] sm:$0xff]
    %v93 = vld [vmem:[#allocation2 + $0x1d0] sm:$0xff]
    %v94 = vld [vmem:[#allocation2 + $0x1d8] sm:$0xff]
    %v95 = vld [vmem:[#allocation2 + $0x1e0] sm:$0xff]
    %v96 = vld [vmem:[#allocation2 + $0x1e8] sm:$0xff]
    %v97 = vld [vmem:[#allocation2 + $0x1f0] sm:$0xff]
    %v98 = vld [vmem:[#allocation2 + $0x1f8] sm:$0xff]
    %v99 = vld [vmem:[#allocation2 + $0x200] sm:$0xff]
    %v100 = vld [vmem:[#allocation2 + $0x208] sm:$0xff]
    %v101 = vld [vmem:[#allocation2 + $0x210] sm:$0xff]
    %v102 = vld [vmem:[#allocation2 + $0x218] sm:$0xff]
    %v103 = vld [vmem:[#allocation2 + $0x220] sm:$0xff]
    %v104 = vld [vmem:[#allocation2 + $0x228] sm:$0xff]
    %v105 = vld [vmem:[#allocation2 + $0x230] sm:$0xff]
    %v106 = vld [vmem:[#allocation2 + $0x238] sm:$0xff]
    %v107 = vld [vmem:[#allocation2 + $0x240] sm:$0xff]
    %v108 = vld [vmem:[#allocation2 + $0x248] sm:$0xff]
    %v109 = vld [vmem:[#allocation2 + $0x250] sm:$0xff]
    %v110 = vld [vmem:[#allocation2 + $0x258] sm:$0xff]
    %v111 = vld [vmem:[#allocation2 + $0x260] sm:$0xff]
    %v112 = vld [vmem:[#allocation2 + $0x268] sm:$0xff]
    %v113 = vld [vmem:[#allocation2 + $0x270] sm:$0xff]
    %v114 = vld [vmem:[#allocation2 + $0x278] sm:$0xff]
    %v115 = vld [vmem:[#allocation2 + $0x280] sm:$0xff]
    %v116 = vld [vmem:[#allocation2 + $0x288] sm:$0xff]
    %v117 = vld [vmem:[#allocation2 + $0x290] sm:$0xff]
    %v118 = vld [vmem:[#allocation2 + $0x298] sm:$0xff]
    %v119 = vld [vmem:[#allocation2 + $0x2a0] sm:$0xff]
    %v120 = vld [vmem:[#allocation2 + $0x2a8] sm:$0xff]
    %v121 = vld [vmem:[#allocation2 + $0x2b0] sm:$0xff]
    %v122 = vld [vmem:[#allocation2 + $0x2b8] sm:$0xff]
    %v123 = vld [vmem:[#allocation2 + $0x2c0] sm:$0xff]
    %v124 = vld [vmem:[#allocation2 + $0x2c8] sm:$0xff]
    %v125 = vld [vmem:[#allocation2 + $0x2d0] sm:$0xff]
    %v126 = vld [vmem:[#allocation2 + $0x2d8] sm:$0xff]
    %v127 = vld [vmem:[#allocation2 + $0x2e0] sm:$0xff]
    %v128 = vld [vmem:[#allocation2 + $0x2e8] sm:$0xff]
    %v129 = vld [vmem:[#allocation2 + $0x2f0] sm:$0xff]
    %v130 = vld [vmem:[#allocation2 + $0x2f8] sm:$0xff]
    %v131 = vld [vmem:[#allocation2 + $0x300] sm:$0xff]
    %v132 = vld [vmem:[#allocation2 + $0x308] sm:$0xff]
    %v133 = vld [vmem:[#allocation2 + $0x310] sm:$0xff]
    %v134 = vld [vmem:[#allocation2 + $0x318] sm:$0xff]
    %v135 = vld [vmem:[#allocation2 + $0x320] sm:$0xff]
    %v136 = vld [vmem:[#allocation2 + $0x328] sm:$0xff]
    %v137 = vld [vmem:[#allocation2 + $0x330] sm:$0xff]
    %v138 = vld [vmem:[#allocation2 + $0x338] sm:$0xff]
    %v139 = vld [vmem:[#allocation2 + $0x340] sm:$0xff]
    %v140 = vld [vmem:[#allocation2 + $0x348] sm:$0xff]
    %v141 = vld [vmem:[#allocation2 + $0x350] sm:$0xff]
    %v142 = vld [vmem:[#allocation2 + $0x358] sm:$0xff]
    %v143 = vld [vmem:[#allocation2 + $0x360] sm:$0xff]
    %v144 = vld [vmem:[#allocation2 + $0x368] sm:$0xff]
    %v145 = vld [vmem:[#allocation2 + $0x370] sm:$0xff]
    %v146 = vld [vmem:[#allocation2 + $0x378] sm:$0xff]
    %v147 = vld [vmem:[#allocation2 + $0x380] sm:$0xff]
    %v148 = vld [vmem:[#allocation2 + $0x388] sm:$0xff]
    %v149 = vld [vmem:[#allocation2 + $0x390] sm:$0xff]
    %v150 = vld [vmem:[#allocation2 + $0x398] sm:$0xff]
    %v151 = vld [vmem:[#allocation2 + $0x3a0] sm:$0xff]
    %v152 = vld [vmem:[#allocation2 + $0x3a8] sm:$0xff]
    %v153 = vld [vmem:[#allocation2 + $0x3b0] sm:$0xff]
    %v154 = vld [vmem:[#allocation2 + $0x3b8] sm:$0xff]
    %v155 = vld [vmem:[#allocation2 + $0x3c0] sm:$0xff]
    %v156 = vld [vmem:[#allocation2 + $0x3c8] sm:$0xff]
    %v157 = vld [vmem:[#allocation2 + $0x3d0] sm:$0xff]
    %v158 = vld [vmem:[#allocation2 + $0x3d8] sm:$0xff]
    %v159 = vld [vmem:[#allocation2 + $0x3e0] sm:$0xff]
    %v160 = vld [vmem:[#allocation2 + $0x3e8] sm:$0xff]
    %v161 = vld [vmem:[#allocation2 + $0x3f0] sm:$0xff]
    %v162 = vld [vmem:[#allocation2 + $0x3f8] sm:$0xff]
    %v163 = vld [vmem:[#allocation2 + $0x400] sm:$0xff]
    %v164 = vld [vmem:[#allocation2 + $0x408] sm:$0xff]
    %v165 = vld [vmem:[#allocation2 + $0x410] sm:$0xff]
    %v166 = vld [vmem:[#allocation2 + $0x418] sm:$0xff]
    %v167 = vld [vmem:[#allocation2 + $0x420] sm:$0xff]
    %v168 = vld [vmem:[#allocation2 + $0x428] sm:$0xff]
    %v169 = vld [vmem:[#allocation2 + $0x430] sm:$0xff]
    %v170 = vld [vmem:[#allocation2 + $0x438] sm:$0xff]
    %v171 = vld [vmem:[#allocation2 + $0x440] sm:$0xff]
    %v172 = vld [vmem:[#allocation2 + $0x448] sm:$0xff]
    %v173 = vld [vmem:[#allocation2 + $0x450] sm:$0xff]
    %v174 = vld [vmem:[#allocation2 + $0x458] sm:$0xff]
    %v175 = vld [vmem:[#allocation2 + $0x460] sm:$0xff]
    %v176 = vld [vmem:[#allocation2 + $0x468] sm:$0xff]
    %v177 = vld [vmem:[#allocation2 + $0x470] sm:$0xff]
    %v178 = vld [vmem:[#allocation2 + $0x478] sm:$0xff]
    %v181 = vunpack.c.l.b16 %v33
    %v182 = vunpack.c.h.b16 %v33
    %v183 = vunpack.c.l.b16 %v34
    %v184 = vpack.c.b16 %v181, %v181
    %v185 = vpack.c.b16 %v182, %v182
    %v186 = vpack.c.b16 %v183, %v183
    %v333 = vunpack.c.l.b16 %v35
    %v334 = vunpack.c.h.b16 %v35
    %v335 = vunpack.c.l.b16 %v36
    %v336 = vunpack.c.h.b16 %v36
    %v337 = vunpack.c.l.b16 %v37
    %v338 = vunpack.c.h.b16 %v37
    %v339 = vunpack.c.l.b16 %v38
    %v340 = vunpack.c.h.b16 %v38
    %v341 = vunpack.c.l.b16 %v39
    %v342 = vunpack.c.h.b16 %v39
    %v343 = vunpack.c.l.b16 %v40
    %v344 = vunpack.c.h.b16 %v40
    %v345 = vunpack.c.l.b16 %v41
    %v346 = vunpack.c.h.b16 %v41
    %v347 = vunpack.c.l.b16 %v42
    %v348 = vunpack.c.h.b16 %v42
    %v349 = vunpack.c.l.b16 %v43
    %v350 = vunpack.c.h.b16 %v43
    %v351 = vunpack.c.l.b16 %v44
    %v352 = vunpack.c.h.b16 %v44
    %v353 = vunpack.c.l.b16 %v45
    %v354 = vunpack.c.h.b16 %v45
    %v355 = vunpack.c.l.b16 %v46
    %v356 = vunpack.c.h.b16 %v46
    %v357 = vunpack.c.l.b16 %v47
    %v358 = vunpack.c.h.b16 %v47
    %v359 = vunpack.c.l.b16 %v48
    %v360 = vunpack.c.h.b16 %v48
    %v361 = vunpack.c.l.b16 %v49
    %v362 = vunpack.c.h.b16 %v49
    %v363 = vunpack.c.l.b16 %v50
    %v364 = vunpack.c.h.b16 %v50
    %v365 = vunpack.c.l.b16 %v51
    %v366 = vunpack.c.h.b16 %v51
    %v367 = vunpack.c.l.b16 %v52
    %v368 = vunpack.c.h.b16 %v52
    %v369 = vunpack.c.l.b16 %v53
    %v370 = vunpack.c.h.b16 %v53
    %v371 = vunpack.c.l.b16 %v54
    %v372 = vunpack.c.h.b16 %v54
    %v373 = vunpack.c.l.b16 %v55
    %v374 = vunpack.c.h.b16 %v55
    %v375 = vunpack.c.l.b16 %v56
    %v376 = vunpack.c.h.b16 %v56
    %v377 = vunpack.c.l.b16 %v57
    %v378 = vunpack.c.h.b16 %v57
    %v379 = vunpack.c.l.b16 %v58
    %v380 = vunpack.c.h.b16 %v58
    %v381 = vunpack.c.l.b16 %v59
    %v382 = vunpack.c.h.b16 %v59
    %v383 = vunpack.c.l.b16 %v60
    %v384 = vunpack.c.h.b16 %v60
    %v385 = vunpack.c.l.b16 %v61
    %v386 = vunpack.c.h.b16 %v61
    %v387 = vunpack.c.l.b16 %v62
    %v388 = vunpack.c.h.b16 %v62
    %v389 = vunpack.c.l.b16 %v63
    %v390 = vunpack.c.h.b16 %v63
    %v391 = vunpack.c.l.b16 %v64
    %v392 = vunpack.c.h.b16 %v64
    %v393 = vunpack.c.l.b16 %v65
    %v394 = vunpack.c.h.b16 %v65
    %v395 = vunpack.c.l.b16 %v66
    %v396 = vunpack.c.h.b16 %v66
    %v397 = vunpack.c.l.b16 %v67
    %v398 = vunpack.c.h.b16 %v67
    %v399 = vunpack.c.l.b16 %v68
    %v400 = vunpack.c.h.b16 %v68
    %v401 = vunpack.c.l.b16 %v69
    %v402 = vunpack.c.h.b16 %v69
    %v403 = vunpack.c.l.b16 %v70
    %v404 = vunpack.c.h.b16 %v70
    %v405 = vunpack.c.l.b16 %v71
    %v406 = vunpack.c.h.b16 %v71
    %v407 = vunpack.c.l.b16 %v72
    %v408 = vunpack.c.h.b16 %v72
    %v409 = vunpack.c.l.b16 %v73
    %v410 = vunpack.c.h.b16 %v73
    %v411 = vunpack.c.l.b16 %v74
    %v412 = vunpack.c.h.b16 %v74
    %v413 = vunpack.c.l.b16 %v75
    %v414 = vunpack.c.h.b16 %v75
    %v415 = vunpack.c.l.b16 %v76
    %v416 = vunpack.c.h.b16 %v76
    %v417 = vunpack.c.l.b16 %v77
    %v418 = vunpack.c.h.b16 %v77
    %v419 = vunpack.c.l.b16 %v78
    %v420 = vunpack.c.h.b16 %v78
    %v421 = vunpack.c.l.b16 %v79
    %v422 = vunpack.c.h.b16 %v79
    %v423 = vunpack.c.l.b16 %v80
    %v424 = vunpack.c.h.b16 %v80
    %v425 = vunpack.c.l.b16 %v81
    %v426 = vunpack.c.h.b16 %v81
    %v427 = vunpack.c.l.b16 %v82
    %v428 = vunpack.c.h.b16 %v82
    %v429 = vunpack.c.l.b16 %v83
    %v430 = vunpack.c.h.b16 %v83
    %v431 = vunpack.c.l.b16 %v84
    %v432 = vunpack.c.h.b16 %v84
    %v433 = vunpack.c.l.b16 %v85
    %v434 = vunpack.c.h.b16 %v85
    %v435 = vunpack.c.l.b16 %v86
    %v436 = vunpack.c.h.b16 %v86
    %v437 = vunpack.c.l.b16 %v87
    %v438 = vunpack.c.h.b16 %v87
    %v439 = vunpack.c.l.b16 %v88
    %v440 = vunpack.c.h.b16 %v88
    %v441 = vunpack.c.l.b16 %v89
    %v442 = vunpack.c.h.b16 %v89
    %v443 = vunpack.c.l.b16 %v90
    %v444 = vunpack.c.h.b16 %v90
    %v445 = vunpack.c.l.b16 %v91
    %v446 = vunpack.c.h.b16 %v91
    %v447 = vunpack.c.l.b16 %v92
    %v448 = vunpack.c.h.b16 %v92
    %v449 = vunpack.c.l.b16 %v93
    %v450 = vunpack.c.h.b16 %v93
    %v451 = vunpack.c.l.b16 %v94
    %v452 = vunpack.c.h.b16 %v94
    %v453 = vunpack.c.l.b16 %v95
    %v454 = vunpack.c.h.b16 %v95
    %v455 = vunpack.c.l.b16 %v96
    %v456 = vunpack.c.h.b16 %v96
    %v457 = vunpack.c.l.b16 %v97
    %v458 = vunpack.c.h.b16 %v97
    %v459 = vunpack.c.l.b16 %v98
    %v460 = vunpack.c.h.b16 %v98
    %v461 = vunpack.c.l.b16 %v99
    %v462 = vunpack.c.h.b16 %v99
    %v463 = vunpack.c.l.b16 %v100
    %v464 = vunpack.c.h.b16 %v100
    %v465 = vunpack.c.l.b16 %v101
    %v466 = vunpack.c.h.b16 %v101
    %v467 = vunpack.c.l.b16 %v102
    %v468 = vunpack.c.h.b16 %v102
    %v469 = vunpack.c.l.b16 %v103
    %v470 = vunpack.c.h.b16 %v103
    %v471 = vunpack.c.l.b16 %v104
    %v472 = vunpack.c.h.b16 %v104
    %v473 = vunpack.c.l.b16 %v105
    %v474 = vunpack.c.h.b16 %v105
    %v475 = vunpack.c.l.b16 %v106
    %v476 = vunpack.c.h.b16 %v106
    %v477 = vunpack.c.l.b16 %v107
    %v478 = vunpack.c.h.b16 %v107
    %v479 = vunpack.c.l.b16 %v108
    %v480 = vunpack.c.h.b16 %v108
    %v481 = vunpack.c.l.b16 %v109
    %v482 = vunpack.c.h.b16 %v109
    %v483 = vunpack.c.l.b16 %v110
    %v484 = vunpack.c.h.b16 %v110
    %v485 = vunpack.c.l.b16 %v111
    %v486 = vunpack.c.h.b16 %v111
    %v487 = vunpack.c.l.b16 %v112
    %v488 = vunpack.c.h.b16 %v112
    %v489 = vunpack.c.l.b16 %v113
    %v490 = vunpack.c.h.b16 %v113
    %v491 = vunpack.c.l.b16 %v114
    %v492 = vunpack.c.h.b16 %v114
    %v493 = vunpack.c.l.b16 %v115
    %v494 = vunpack.c.h.b16 %v115
    %v495 = vunpack.c.l.b16 %v116
    %v496 = vunpack.c.h.b16 %v116
    %v497 = vunpack.c.l.b16 %v117
    %v498 = vunpack.c.h.b16 %v117
    %v499 = vunpack.c.l.b16 %v118
    %v500 = vunpack.c.h.b16 %v118
    %v501 = vunpack.c.l.b16 %v119
    %v502 = vunpack.c.h.b16 %v119
    %v503 = vunpack.c.l.b16 %v120
    %v504 = vunpack.c.h.b16 %v120
    %v505 = vunpack.c.l.b16 %v121
    %v506 = vunpack.c.h.b16 %v121
    %v507 = vunpack.c.l.b16 %v122
    %v508 = vunpack.c.h.b16 %v122
    %v509 = vunpack.c.l.b16 %v123
    %v510 = vunpack.c.h.b16 %v123
    %v511 = vunpack.c.l.b16 %v124
    %v512 = vunpack.c.h.b16 %v124
    %v513 = vunpack.c.l.b16 %v125
    %v514 = vunpack.c.h.b16 %v125
    %v515 = vunpack.c.l.b16 %v126
    %v516 = vunpack.c.h.b16 %v126
    %v517 = vunpack.c.l.b16 %v127
    %v518 = vunpack.c.h.b16 %v127
    %v519 = vunpack.c.l.b16 %v128
    %v520 = vunpack.c.h.b16 %v128
    %v521 = vunpack.c.l.b16 %v129
    %v522 = vunpack.c.h.b16 %v129
    %v523 = vunpack.c.l.b16 %v130
    %v524 = vunpack.c.h.b16 %v130
    %v525 = vunpack.c.l.b16 %v131
    %v526 = vunpack.c.h.b16 %v131
    %v527 = vunpack.c.l.b16 %v132
    %v528 = vunpack.c.h.b16 %v132
    %v529 = vunpack.c.l.b16 %v133
    %v530 = vunpack.c.h.b16 %v133
    %v531 = vunpack.c.l.b16 %v134
    %v532 = vunpack.c.h.b16 %v134
    %v533 = vunpack.c.l.b16 %v135
    %v534 = vunpack.c.h.b16 %v135
    %v535 = vunpack.c.l.b16 %v136
    %v536 = vunpack.c.h.b16 %v136
    %v537 = vunpack.c.l.b16 %v137
    %v538 = vunpack.c.h.b16 %v137
    %v539 = vunpack.c.l.b16 %v138
    %v540 = vunpack.c.h.b16 %v138
    %v541 = vunpack.c.l.b16 %v139
    %v542 = vunpack.c.h.b16 %v139
    %v543 = vunpack.c.l.b16 %v140
    %v544 = vunpack.c.h.b16 %v140
    %v545 = vunpack.c.l.b16 %v141
    %v546 = vunpack.c.h.b16 %v141
    %v547 = vunpack.c.l.b16 %v142
    %v548 = vunpack.c.h.b16 %v142
    %v549 = vunpack.c.l.b16 %v143
    %v550 = vunpack.c.h.b16 %v143
    %v551 = vunpack.c.l.b16 %v144
    %v552 = vunpack.c.h.b16 %v144
    %v553 = vunpack.c.l.b16 %v145
    %v554 = vunpack.c.h.b16 %v145
    %v555 = vunpack.c.l.b16 %v146
    %v556 = vunpack.c.h.b16 %v146
    %v557 = vunpack.c.l.b16 %v147
    %v558 = vunpack.c.h.b16 %v147
    %v559 = vunpack.c.l.b16 %v148
    %v560 = vunpack.c.h.b16 %v148
    %v561 = vunpack.c.l.b16 %v149
    %v562 = vunpack.c.h.b16 %v149
    %v563 = vunpack.c.l.b16 %v150
    %v564 = vunpack.c.h.b16 %v150
    %v565 = vunpack.c.l.b16 %v151
    %v566 = vunpack.c.h.b16 %v151
    %v567 = vunpack.c.l.b16 %v152
    %v568 = vunpack.c.h.b16 %v152
    %v569 = vunpack.c.l.b16 %v153
    %v570 = vunpack.c.h.b16 %v153
    %v571 = vunpack.c.l.b16 %v154
    %v572 = vunpack.c.h.b16 %v154
    %v573 = vunpack.c.l.b16 %v155
    %v574 = vunpack.c.h.b16 %v155
    %v575 = vunpack.c.l.b16 %v156
    %v576 = vunpack.c.h.b16 %v156
    %v577 = vunpack.c.l.b16 %v157
    %v578 = vunpack.c.h.b16 %v157
    %v579 = vunpack.c.l.b16 %v158
    %v580 = vunpack.c.h.b16 %v158
    %v581 = vunpack.c.l.b16 %v159
    %v582 = vunpack.c.h.b16 %v159
    %v583 = vunpack.c.l.b16 %v160
    %v584 = vunpack.c.h.b16 %v160
    %v585 = vunpack.c.l.b16 %v161
    %v586 = vunpack.c.h.b16 %v161
    %v587 = vunpack.c.l.b16 %v162
    %v588 = vunpack.c.h.b16 %v162
    %v589 = vunpack.c.l.b16 %v163
    %v590 = vunpack.c.h.b16 %v163
    %v591 = vunpack.c.l.b16 %v164
    %v592 = vunpack.c.h.b16 %v164
    %v593 = vunpack.c.l.b16 %v165
    %v594 = vunpack.c.h.b16 %v165
    %v595 = vunpack.c.l.b16 %v166
    %v596 = vunpack.c.h.b16 %v166
    %v597 = vunpack.c.l.b16 %v167
    %v598 = vunpack.c.h.b16 %v167
    %v599 = vunpack.c.l.b16 %v168
    %v600 = vunpack.c.h.b16 %v168
    %v601 = vunpack.c.l.b16 %v169
    %v602 = vunpack.c.h.b16 %v169
    %v603 = vunpack.c.l.b16 %v170
    %v604 = vunpack.c.h.b16 %v170
    %v605 = vunpack.c.l.b16 %v171
    %v606 = vunpack.c.h.b16 %v171
    %v607 = vunpack.c.l.b16 %v172
    %v608 = vunpack.c.h.b16 %v172
    %v609 = vunpack.c.l.b16 %v173
    %v610 = vunpack.c.h.b16 %v173
    %v611 = vunpack.c.l.b16 %v174
    %v612 = vunpack.c.h.b16 %v174
    %v613 = vunpack.c.l.b16 %v175
    %v614 = vunpack.c.h.b16 %v175
    %v615 = vunpack.c.l.b16 %v176
    %v616 = vunpack.c.h.b16 %v176
    %v617 = vunpack.c.l.b16 %v177
    %v618 = vunpack.c.h.b16 %v177
    %v619 = vunpack.c.l.b16 %v178
    %v620 = vunpack.c.h.b16 %v178
    %v621 = vpack.c.b16 %v341, %v333
    %v622 = vpack.c.b16 %v342, %v334
    %v623 = vpack.c.b16 %v343, %v335
    %v624 = vpack.c.b16 %v344, %v336
    %v625 = vpack.c.b16 %v345, %v337
    %v626 = vpack.c.b16 %v346, %v338
    %v627 = vpack.c.b16 %v347, %v339
    %v628 = vpack.c.b16 %v348, %v340
    %v629 = vpack.c.b16 %v357, %v349
    %v630 = vpack.c.b16 %v358, %v350
    %v631 = vpack.c.b16 %v359, %v351
    %v632 = vpack.c.b16 %v360, %v352
    %v633 = vpack.c.b16 %v361, %v353
    %v634 = vpack.c.b16 %v362, %v354
    %v635 = vpack.c.b16 %v363, %v355
    %v636 = vpack.c.b16 %v364, %v356
    %v637 = vpack.c.b16 %v373, %v365
    %v638 = vpack.c.b16 %v374, %v366
    %v639 = vpack.c.b16 %v375, %v367
    %v640 = vpack.c.b16 %v376, %v368
    %v641 = vpack.c.b16 %v377, %v369
    %v642 = vpack.c.b16 %v378, %v370
    %v643 = vpack.c.b16 %v379, %v371
    %v644 = vpack.c.b16 %v380, %v372
    %v645 = vpack.c.b16 %v389, %v381
    %v646 = vpack.c.b16 %v390, %v382
    %v647 = vpack.c.b16 %v391, %v383
    %v648 = vpack.c.b16 %v392, %v384
    %v649 = vpack.c.b16 %v393, %v385
    %v650 = vpack.c.b16 %v394, %v386
    %v651 = vpack.c.b16 %v395, %v387
    %v652 = vpack.c.b16 %v396, %v388
    %v653 = vpack.c.b16 %v405, %v397
    %v654 = vpack.c.b16 %v406, %v398
    %v655 = vpack.c.b16 %v407, %v399
    %v656 = vpack.c.b16 %v408, %v400
    %v657 = vpack.c.b16 %v409, %v401
    %v658 = vpack.c.b16 %v410, %v402
    %v659 = vpack.c.b16 %v411, %v403
    %v660 = vpack.c.b16 %v412, %v404
    %v661 = vpack.c.b16 %v421, %v413
    %v662 = vpack.c.b16 %v422, %v414
    %v663 = vpack.c.b16 %v423, %v415
    %v664 = vpack.c.b16 %v424, %v416
    %v665 = vpack.c.b16 %v425, %v417
    %v666 = vpack.c.b16 %v426, %v418
    %v667 = vpack.c.b16 %v427, %v419
    %v668 = vpack.c.b16 %v428, %v420
    %v669 = vpack.c.b16 %v437, %v429
    %v670 = vpack.c.b16 %v438, %v430
    %v671 = vpack.c.b16 %v439, %v431
    %v672 = vpack.c.b16 %v440, %v432
    %v673 = vpack.c.b16 %v441, %v433
    %v674 = vpack.c.b16 %v442, %v434
    %v675 = vpack.c.b16 %v443, %v435
    %v676 = vpack.c.b16 %v444, %v436
    %v677 = vpack.c.b16 %v453, %v445
    %v678 = vpack.c.b16 %v454, %v446
    %v679 = vpack.c.b16 %v455, %v447
    %v680 = vpack.c.b16 %v456, %v448
    %v681 = vpack.c.b16 %v457, %v449
    %v682 = vpack.c.b16 %v458, %v450
    %v683 = vpack.c.b16 %v459, %v451
    %v684 = vpack.c.b16 %v460, %v452
    %v685 = vpack.c.b16 %v469, %v461
    %v686 = vpack.c.b16 %v470, %v462
    %v687 = vpack.c.b16 %v471, %v463
    %v688 = vpack.c.b16 %v472, %v464
    %v689 = vpack.c.b16 %v473, %v465
    %v690 = vpack.c.b16 %v474, %v466
    %v691 = vpack.c.b16 %v475, %v467
    %v692 = vpack.c.b16 %v476, %v468
    %v693 = vpack.c.b16 %v485, %v477
    %v694 = vpack.c.b16 %v486, %v478
    %v695 = vpack.c.b16 %v487, %v479
    %v696 = vpack.c.b16 %v488, %v480
    %v697 = vpack.c.b16 %v489, %v481
    %v698 = vpack.c.b16 %v490, %v482
    %v699 = vpack.c.b16 %v491, %v483
    %v700 = vpack.c.b16 %v492, %v484
    %v701 = vpack.c.b16 %v501, %v493
    %v702 = vpack.c.b16 %v502, %v494
    %v703 = vpack.c.b16 %v503, %v495
    %v704 = vpack.c.b16 %v504, %v496
    %v705 = vpack.c.b16 %v505, %v497
    %v706 = vpack.c.b16 %v506, %v498
    %v707 = vpack.c.b16 %v507, %v499
    %v708 = vpack.c.b16 %v508, %v500
    %v709 = vpack.c.b16 %v517, %v509
    %v710 = vpack.c.b16 %v518, %v510
    %v711 = vpack.c.b16 %v519, %v511
    %v712 = vpack.c.b16 %v520, %v512
    %v713 = vpack.c.b16 %v521, %v513
    %v714 = vpack.c.b16 %v522, %v514
    %v715 = vpack.c.b16 %v523, %v515
    %v716 = vpack.c.b16 %v524, %v516
    %v717 = vpack.c.b16 %v533, %v525
    %v718 = vpack.c.b16 %v534, %v526
    %v719 = vpack.c.b16 %v535, %v527
    %v720 = vpack.c.b16 %v536, %v528
    %v721 = vpack.c.b16 %v537, %v529
    %v722 = vpack.c.b16 %v538, %v530
    %v723 = vpack.c.b16 %v539, %v531
    %v724 = vpack.c.b16 %v540, %v532
    %v725 = vpack.c.b16 %v549, %v541
    %v726 = vpack.c.b16 %v550, %v542
    %v727 = vpack.c.b16 %v551, %v543
    %v728 = vpack.c.b16 %v552, %v544
    %v729 = vpack.c.b16 %v553, %v545
    %v730 = vpack.c.b16 %v554, %v546
    %v731 = vpack.c.b16 %v555, %v547
    %v732 = vpack.c.b16 %v556, %v548
    %v733 = vpack.c.b16 %v565, %v557
    %v734 = vpack.c.b16 %v566, %v558
    %v735 = vpack.c.b16 %v567, %v559
    %v736 = vpack.c.b16 %v568, %v560
    %v737 = vpack.c.b16 %v569, %v561
    %v738 = vpack.c.b16 %v570, %v562
    %v739 = vpack.c.b16 %v571, %v563
    %v740 = vpack.c.b16 %v572, %v564
    %v741 = vpack.c.b16 %v581, %v573
    %v742 = vpack.c.b16 %v582, %v574
    %v743 = vpack.c.b16 %v583, %v575
    %v744 = vpack.c.b16 %v584, %v576
    %v745 = vpack.c.b16 %v585, %v577
    %v746 = vpack.c.b16 %v586, %v578
    %v747 = vpack.c.b16 %v587, %v579
    %v748 = vpack.c.b16 %v588, %v580
    %v749 = vpack.c.b16 %v597, %v589
    %v750 = vpack.c.b16 %v598, %v590
    %v751 = vpack.c.b16 %v599, %v591
    %v752 = vpack.c.b16 %v600, %v592
    %v753 = vpack.c.b16 %v601, %v593
    %v754 = vpack.c.b16 %v602, %v594
    %v755 = vpack.c.b16 %v603, %v595
    %v756 = vpack.c.b16 %v604, %v596
    %v757 = vpack.c.b16 %v613, %v605
    %v758 = vpack.c.b16 %v614, %v606
    %v759 = vpack.c.b16 %v615, %v607
    %v760 = vpack.c.b16 %v616, %v608
    %v761 = vpack.c.b16 %v617, %v609
    %v762 = vpack.c.b16 %v618, %v610
    %v763 = vpack.c.b16 %v619, %v611
    %v764 = vpack.c.b16 %v620, %v612
    %vm909 = vcmask 261120
    %v911 = vsel %vm909, %v186, 0
    %913 = vmatprep.subr.bf16.mxu0 %v622
    %914 = vmatpush1.bf16.msra.mxu0 %v621
    %915 = vmatprep.subr.bf16.mxu0 %v630
    %916 = vmatpush1.bf16.msra.mxu0 %v629
    %917 = vmatprep.subr.bf16.mxu0 %v638
    %918 = vmatpush1.bf16.msra.mxu0 %v637
    %919 = vmatprep.subr.bf16.mxu0 %v646
    %920 = vmatpush1.bf16.msra.mxu0 %v645
    %921 = vmatprep.subr.bf16.mxu0 %v654
    %922 = vmatpush1.bf16.msra.mxu0 %v653
    %923 = vmatprep.subr.bf16.mxu0 %v662
    %924 = vmatpush1.bf16.msra.mxu0 %v661
    %925 = vmatprep.subr.bf16.mxu0 %v670
    %926 = vmatpush1.bf16.msra.mxu0 %v669
    %927 = vmatprep.subr.bf16.mxu0 %v678
    %928 = vmatpush1.bf16.msra.mxu0 %v677
    %929 = vmatprep.subr.bf16.mxu0 %v686
    %930 = vmatpush1.bf16.msra.mxu0 %v685
    %931 = vmatprep.subr.bf16.mxu0 %v694
    %932 = vmatpush1.bf16.msra.mxu0 %v693
    %933 = vmatprep.subr.bf16.mxu0 %v702
    %934 = vmatpush1.bf16.msra.mxu0 %v701
    %935 = vmatprep.subr.bf16.mxu0 %v710
    %936 = vmatpush1.bf16.msra.mxu0 %v709
    %937 = vmatprep.subr.bf16.mxu0 %v718
    %938 = vmatpush1.bf16.msra.mxu0 %v717
    %939 = vmatprep.subr.bf16.mxu0 %v726
    %940 = vmatpush1.bf16.msra.mxu0 %v725
    %941 = vmatprep.subr.bf16.mxu0 %v734
    %942 = vmatpush1.bf16.msra.mxu0 %v733
    %943 = vmatprep.subr.bf16.mxu0 %v742
    %944 = vmatpush1.bf16.msra.mxu0 %v741
    %945 = vmatprep.mubr.bf16.mxu0 %v185
    %946 = vmatmul.mubr.bf16.gmra.mrb[0].mxu0 %v184
    %v947 = vpop.f32.mrb[0].mxu0
    %v948 = vadd.f32 0.0, %v947
    %v949 = vpop.f32.mrb[0].mxu0
    %v950 = vadd.f32 0.0, %v949
    %v951 = vpop.f32.mrb[0].mxu0
    %v952 = vpop.f32.mrb[0].mxu0
    %953 = vdwg.mxu0
    %954 = vmatprep.subr.bf16.mxu0 %v750
    %955 = vmatpush1.bf16.msra.mxu0 %v749
    %956 = vmatprep.subr.bf16.mxu0 %v758
    %957 = vmatpush1.bf16.msra.mxu0 %v757
    %958 = vmatprep.subr.bf16.mxu0 0
    %959 = vmatpush1.bf16.msra.mxu0 0
    %960 = vmatprep.subr.bf16.mxu0 0
    %961 = vmatpush1.bf16.msra.mxu0 0
    %962 = vmatprep.subr.bf16.mxu0 0
    %963 = vmatpush1.bf16.msra.mxu0 0
    %964 = vmatprep.subr.bf16.mxu0 0
    %965 = vmatpush1.bf16.msra.mxu0 0
    %966 = vmatprep.subr.bf16.mxu0 0
    %967 = vmatpush1.bf16.msra.mxu0 0
    %968 = vmatprep.subr.bf16.mxu0 0
    %969 = vmatpush1.bf16.msra.mxu0 0
    %970 = vmatprep.subr.bf16.mxu0 0
    %971 = vmatpush1.bf16.msra.mxu0 0
    %972 = vmatprep.subr.bf16.mxu0 0
    %973 = vmatpush1.bf16.msra.mxu0 0
    %974 = vmatprep.subr.bf16.mxu0 0
    %975 = vmatpush1.bf16.msra.mxu0 0
    %976 = vmatprep.subr.bf16.mxu0 0
    %977 = vmatpush1.bf16.msra.mxu0 0
    %978 = vmatprep.subr.bf16.mxu0 0
    %979 = vmatpush1.bf16.msra.mxu0 0
    %980 = vmatprep.subr.bf16.mxu0 0
    %981 = vmatpush1.bf16.msra.mxu0 0
    %982 = vmatprep.subr.bf16.mxu0 0
    %983 = vmatpush1.bf16.msra.mxu0 0
    %984 = vmatprep.subr.bf16.mxu0 0
    %985 = vmatpush1.bf16.msra.mxu0 0
    %986 = vmatprep.mubr.bf16.mxu0 0
    %987 = vmatmul.mubr.bf16.gmra.mrb[0].mxu0 %v911
    %v988 = vpop.f32.mrb[0].mxu0
    %v989 = vadd.f32 %v948, %v988
    %v990 = vpop.f32.mrb[0].mxu0
    %v991 = vadd.f32 %v950, %v990
    %v992 = vpop.f32.mrb[0].mxu0
    %v993 = vpop.f32.mrb[0].mxu0
    %994 = vdwg.mxu0
    %995 = vmatprep.subr.bf16.mxu0 %v624
    %996 = vmatpush1.bf16.msra.mxu0 %v623
    %997 = vmatprep.subr.bf16.mxu0 %v632
    %998 = vmatpush1.bf16.msra.mxu0 %v631
    %999 = vmatprep.subr.bf16.mxu0 %v640
    %1000 = vmatpush1.bf16.msra.mxu0 %v639
    %1001 = vmatprep.subr.bf16.mxu0 %v648
    %1002 = vmatpush1.bf16.msra.mxu0 %v647
    %1003 = vmatprep.subr.bf16.mxu0 %v656
    %1004 = vmatpush1.bf16.msra.mxu0 %v655
    %1005 = vmatprep.subr.bf16.mxu0 %v664
    %1006 = vmatpush1.bf16.msra.mxu0 %v663
    %1007 = vmatprep.subr.bf16.mxu0 %v672
    %1008 = vmatpush1.bf16.msra.mxu0 %v671
    %1009 = vmatprep.subr.bf16.mxu0 %v680
    %1010 = vmatpush1.bf16.msra.mxu0 %v679
    %1011 = vmatprep.subr.bf16.mxu0 %v688
    %1012 = vmatpush1.bf16.msra.mxu0 %v687
    %1013 = vmatprep.subr.bf16.mxu0 %v696
    %1014 = vmatpush1.bf16.msra.mxu0 %v695
    %1015 = vmatprep.subr.bf16.mxu0 %v704
    %1016 = vmatpush1.bf16.msra.mxu0 %v703
    %1017 = vmatprep.subr.bf16.mxu0 %v712
    %1018 = vmatpush1.bf16.msra.mxu0 %v711
    %1019 = vmatprep.subr.bf16.mxu0 %v720
    %1020 = vmatpush1.bf16.msra.mxu0 %v719
    %1021 = vmatprep.subr.bf16.mxu0 %v728
    %1022 = vmatpush1.bf16.msra.mxu0 %v727
    %1023 = vmatprep.subr.bf16.mxu0 %v736
    %1024 = vmatpush1.bf16.msra.mxu0 %v735
    %1025 = vmatprep.subr.bf16.mxu0 %v744
    %1026 = vmatpush1.bf16.msra.mxu0 %v743
    %1027 = vmatprep.mubr.bf16.mxu0 %v185
    %1028 = vmatmul.mubr.bf16.gmra.mrb[0].mxu0 %v184
    %v1029 = vpop.f32.mrb[0].mxu0
    %v1030 = vadd.f32 0.0, %v1029
    %v1031 = vpop.f32.mrb[0].mxu0
    %v1032 = vadd.f32 0.0, %v1031
    %v1033 = vpop.f32.mrb[0].mxu0
    %v1034 = vpop.f32.mrb[0].mxu0
    %1035 = vdwg.mxu0
    %1036 = vmatprep.subr.bf16.mxu0 %v752
    %1037 = vmatpush1.bf16.msra.mxu0 %v751
    %1038 = vmatprep.subr.bf16.mxu0 %v760
    %1039 = vmatpush1.bf16.msra.mxu0 %v759
    %1040 = vmatprep.subr.bf16.mxu0 0
    %1041 = vmatpush1.bf16.msra.mxu0 0
    %1042 = vmatprep.subr.bf16.mxu0 0
    %1043 = vmatpush1.bf16.msra.mxu0 0
    %1044 = vmatprep.subr.bf16.mxu0 0
    %1045 = vmatpush1.bf16.msra.mxu0 0
    %1046 = vmatprep.subr.bf16.mxu0 0
    %1047 = vmatpush1.bf16.msra.mxu0 0
    %1048 = vmatprep.subr.bf16.mxu0 0
    %1049 = vmatpush1.bf16.msra.mxu0 0
    %1050 = vmatprep.subr.bf16.mxu0 0
    %1051 = vmatpush1.bf16.msra.mxu0 0
    %1052 = vmatprep.subr.bf16.mxu0 0
    %1053 = vmatpush1.bf16.msra.mxu0 0
    %1054 = vmatprep.subr.bf16.mxu0 0
    %1055 = vmatpush1.bf16.msra.mxu0 0
    %1056 = vmatprep.subr.bf16.mxu0 0
    %1057 = vmatpush1.bf16.msra.mxu0 0
    %1058 = vmatprep.subr.bf16.mxu0 0
    %1059 = vmatpush1.bf16.msra.mxu0 0
    %1060 = vmatprep.subr.bf16.mxu0 0
    %1061 = vmatpush1.bf16.msra.mxu0 0
    %1062 = vmatprep.subr.bf16.mxu0 0
    %1063 = vmatpush1.bf16.msra.mxu0 0
    %1064 = vmatprep.subr.bf16.mxu0 0
    %1065 = vmatpush1.bf16.msra.mxu0 0
    %1066 = vmatprep.subr.bf16.mxu0 0
    %1067 = vmatpush1.bf16.msra.mxu0 0
    %1068 = vmatprep.mubr.bf16.mxu0 0
    %1069 = vmatmul.mubr.bf16.gmra.mrb[0].mxu0 %v911
    %v1070 = vpop.f32.mrb[0].mxu0
    %v1071 = vadd.f32 %v1030, %v1070
    %v1072 = vpop.f32.mrb[0].mxu0
    %v1073 = vadd.f32 %v1032, %v1072
    %v1074 = vpop.f32.mrb[0].mxu0
    %v1075 = vpop.f32.mrb[0].mxu0
    %1076 = vdwg.mxu0
    %1077 = vmatprep.subr.bf16.mxu0 %v626
    %1078 = vmatpush1.bf16.msra.mxu0 %v625
    %1079 = vmatprep.subr.bf16.mxu0 %v634
    %1080 = vmatpush1.bf16.msra.mxu0 %v633
    %1081 = vmatprep.subr.bf16.mxu0 %v642
    %1082 = vmatpush1.bf16.msra.mxu0 %v641
    %1083 = vmatprep.subr.bf16.mxu0 %v650
    %1084 = vmatpush1.bf16.msra.mxu0 %v649
    %1085 = vmatprep.subr.bf16.mxu0 %v658
    %1086 = vmatpush1.bf16.msra.mxu0 %v657
    %1087 = vmatprep.subr.bf16.mxu0 %v666
    %1088 = vmatpush1.bf16.msra.mxu0 %v665
    %1089 = vmatprep.subr.bf16.mxu0 %v674
    %1090 = vmatpush1.bf16.msra.mxu0 %v673
    %1091 = vmatprep.subr.bf16.mxu0 %v682
    %1092 = vmatpush1.bf16.msra.mxu0 %v681
    %1093 = vmatprep.subr.bf16.mxu0 %v690
    %1094 = vmatpush1.bf16.msra.mxu0 %v689
    %1095 = vmatprep.subr.bf16.mxu0 %v698
    %1096 = vmatpush1.bf16.msra.mxu0 %v697
    %1097 = vmatprep.subr.bf16.mxu0 %v706
    %1098 = vmatpush1.bf16.msra.mxu0 %v705
    %1099 = vmatprep.subr.bf16.mxu0 %v714
    %1100 = vmatpush1.bf16.msra.mxu0 %v713
    %1101 = vmatprep.subr.bf16.mxu0 %v722
    %1102 = vmatpush1.bf16.msra.mxu0 %v721
    %1103 = vmatprep.subr.bf16.mxu0 %v730
    %1104 = vmatpush1.bf16.msra.mxu0 %v729
    %1105 = vmatprep.subr.bf16.mxu0 %v738
    %1106 = vmatpush1.bf16.msra.mxu0 %v737
    %1107 = vmatprep.subr.bf16.mxu0 %v746
    %1108 = vmatpush1.bf16.msra.mxu0 %v745
    %1109 = vmatprep.mubr.bf16.mxu0 %v185
    %1110 = vmatmul.mubr.bf16.gmra.mrb[0].mxu0 %v184
    %v1111 = vpop.f32.mrb[0].mxu0
    %v1112 = vadd.f32 0.0, %v1111
    %v1113 = vpop.f32.mrb[0].mxu0
    %v1114 = vadd.f32 0.0, %v1113
    %v1115 = vpop.f32.mrb[0].mxu0
    %v1116 = vpop.f32.mrb[0].mxu0
    %1117 = vdwg.mxu0
    %1118 = vmatprep.subr.bf16.mxu0 %v754
    %1119 = vmatpush1.bf16.msra.mxu0 %v753
    %1120 = vmatprep.subr.bf16.mxu0 %v762
    %1121 = vmatpush1.bf16.msra.mxu0 %v761
    %1122 = vmatprep.subr.bf16.mxu0 0
    %1123 = vmatpush1.bf16.msra.mxu0 0
    %1124 = vmatprep.subr.bf16.mxu0 0
    %1125 = vmatpush1.bf16.msra.mxu0 0
    %1126 = vmatprep.subr.bf16.mxu0 0
    %1127 = vmatpush1.bf16.msra.mxu0 0
    %1128 = vmatprep.subr.bf16.mxu0 0
    %1129 = vmatpush1.bf16.msra.mxu0 0
    %1130 = vmatprep.subr.bf16.mxu0 0
    %1131 = vmatpush1.bf16.msra.mxu0 0
    %1132 = vmatprep.subr.bf16.mxu0 0
    %1133 = vmatpush1.bf16.msra.mxu0 0
    %1134 = vmatprep.subr.bf16.mxu0 0
    %1135 = vmatpush1.bf16.msra.mxu0 0
    %1136 = vmatprep.subr.bf16.mxu0 0
    %1137 = vmatpush1.bf16.msra.mxu0 0
    %1138 = vmatprep.subr.bf16.mxu0 0
    %1139 = vmatpush1.bf16.msra.mxu0 0
    %1140 = vmatprep.subr.bf16.mxu0 0
    %1141 = vmatpush1.bf16.msra.mxu0 0
    %1142 = vmatprep.subr.bf16.mxu0 0
    %1143 = vmatpush1.bf16.msra.mxu0 0
    %1144 = vmatprep.subr.bf16.mxu0 0
    %1145 = vmatpush1.bf16.msra.mxu0 0
    %1146 = vmatprep.subr.bf16.mxu0 0
    %1147 = vmatpush1.bf16.msra.mxu0 0
    %1148 = vmatprep.subr.bf16.mxu0 0
    %1149 = vmatpush1.bf16.msra.mxu0 0
    %1150 = vmatprep.mubr.bf16.mxu0 0
    %1151 = vmatmul.mubr.bf16.gmra.mrb[0].mxu0 %v911
    %v1152 = vpop.f32.mrb[0].mxu0
    %v1153 = vadd.f32 %v1112, %v1152
    %v1154 = vpop.f32.mrb[0].mxu0
    %v1155 = vadd.f32 %v1114, %v1154
    %v1156 = vpop.f32.mrb[0].mxu0
    %v1157 = vpop.f32.mrb[0].mxu0
    %1158 = vdwg.mxu0
    %1159 = vmatprep.subr.bf16.mxu0 %v628
    %1160 = vmatpush1.bf16.msra.mxu0 %v627
    %1161 = vmatprep.subr.bf16.mxu0 %v636
    %1162 = vmatpush1.bf16.msra.mxu0 %v635
    %1163 = vmatprep.subr.bf16.mxu0 %v644
    %1164 = vmatpush1.bf16.msra.mxu0 %v643
    %1165 = vmatprep.subr.bf16.mxu0 %v652
    %1166 = vmatpush1.bf16.msra.mxu0 %v651
    %1167 = vmatprep.subr.bf16.mxu0 %v660
    %1168 = vmatpush1.bf16.msra.mxu0 %v659
    %1169 = vmatprep.subr.bf16.mxu0 %v668
    %1170 = vmatpush1.bf16.msra.mxu0 %v667
    %1171 = vmatprep.subr.bf16.mxu0 %v676
    %1172 = vmatpush1.bf16.msra.mxu0 %v675
    %1173 = vmatprep.subr.bf16.mxu0 %v684
    %1174 = vmatpush1.bf16.msra.mxu0 %v683
    %1175 = vmatprep.subr.bf16.mxu0 %v692
    %1176 = vmatpush1.bf16.msra.mxu0 %v691
    %1177 = vmatprep.subr.bf16.mxu0 %v700
    %1178 = vmatpush1.bf16.msra.mxu0 %v699
    %1179 = vmatprep.subr.bf16.mxu0 %v708
    %1180 = vmatpush1.bf16.msra.mxu0 %v707
    %1181 = vmatprep.subr.bf16.mxu0 %v716
    %1182 = vmatpush1.bf16.msra.mxu0 %v715
    %1183 = vmatprep.subr.bf16.mxu0 %v724
    %1184 = vmatpush1.bf16.msra.mxu0 %v723
    %1185 = vmatprep.subr.bf16.mxu0 %v732
    %1186 = vmatpush1.bf16.msra.mxu0 %v731
    %1187 = vmatprep.subr.bf16.mxu0 %v740
    %1188 = vmatpush1.bf16.msra.mxu0 %v739
    %1189 = vmatprep.subr.bf16.mxu0 %v748
    %1190 = vmatpush1.bf16.msra.mxu0 %v747
    %1191 = vmatprep.mubr.bf16.mxu0 %v185
    %1192 = vmatmul.mubr.bf16.gmra.mrb[0].mxu0 %v184
    %v1193 = vpop.f32.mrb[0].mxu0
    %v1194 = vadd.f32 0.0, %v1193
    %v1195 = vpop.f32.mrb[0].mxu0
    %v1196 = vadd.f32 0.0, %v1195
    %v1197 = vpop.f32.mrb[0].mxu0
    %v1198 = vpop.f32.mrb[0].mxu0
    %1199 = vdwg.mxu0
    %1200 = vmatprep.subr.bf16.mxu0 %v756
    %1201 = vmatpush1.bf16.msra.mxu0 %v755
    %1202 = vmatprep.subr.bf16.mxu0 %v764
    %1203 = vmatpush1.bf16.msra.mxu0 %v763
    %1204 = vmatprep.subr.bf16.mxu0 0
    %1205 = vmatpush1.bf16.msra.mxu0 0
    %1206 = vmatprep.subr.bf16.mxu0 0
    %1207 = vmatpush1.bf16.msra.mxu0 0
    %1208 = vmatprep.subr.bf16.mxu0 0
    %1209 = vmatpush1.bf16.msra.mxu0 0
    %1210 = vmatprep.subr.bf16.mxu0 0
    %1211 = vmatpush1.bf16.msra.mxu0 0
    %1212 = vmatprep.subr.bf16.mxu0 0
    %1213 = vmatpush1.bf16.msra.mxu0 0
    %1214 = vmatprep.subr.bf16.mxu0 0
    %1215 = vmatpush1.bf16.msra.mxu0 0
    %1216 = vmatprep.subr.bf16.mxu0 0
    %1217 = vmatpush1.bf16.msra.mxu0 0
    %1218 = vmatprep.subr.bf16.mxu0 0
    %1219 = vmatpush1.bf16.msra.mxu0 0
    %1220 = vmatprep.subr.bf16.mxu0 0
    %1221 = vmatpush1.bf16.msra.mxu0 0
    %1222 = vmatprep.subr.bf16.mxu0 0
    %1223 = vmatpush1.bf16.msra.mxu0 0
    %1224 = vmatprep.subr.bf16.mxu0 0
    %1225 = vmatpush1.bf16.msra.mxu0 0
    %1226 = vmatprep.subr.bf16.mxu0 0
    %1227 = vmatpush1.bf16.msra.mxu0 0
    %1228 = vmatprep.subr.bf16.mxu0 0
    %1229 = vmatpush1.bf16.msra.mxu0 0
    %1230 = vmatprep.subr.bf16.mxu0 0
    %1231 = vmatpush1.bf16.msra.mxu0 0
    %1232 = vmatprep.mubr.bf16.mxu0 0
    %1233 = vmatmul.mubr.bf16.gmra.mrb[0].mxu0 %v911
    %v1234 = vpop.f32.mrb[0].mxu0
    %v1235 = vadd.f32 %v1194, %v1234
    %v1236 = vpop.f32.mrb[0].mxu0
    %v1237 = vadd.f32 %v1196, %v1236
    %v1238 = vpop.f32.mrb[0].mxu0
    %v1239 = vpop.f32.mrb[0].mxu0
    %1240 = vdwg.mxu0
    %v1241 = vmul.f32 %v989, 0.5
    %v1242 = vmul.f32 %v991, 0.5
    %v1243 = vtanh.pop %v1241
    %v1244 = vtanh.pop %v1242
    %v1245 = vmul.f32 %v1243, 0.5
    %v1246 = vmul.f32 %v1244, 0.5
    %v1247 = vadd.f32 %v1245, 0.5
    %v1248 = vadd.f32 %v1246, 0.5
    %v1249 = vmul.f32 %v1071, 0.5
    %v1250 = vmul.f32 %v1073, 0.5
    %v1251 = vtanh.pop %v1249
    %v1252 = vtanh.pop %v1250
    %v1253 = vmul.f32 %v1251, 0.5
    %v1254 = vmul.f32 %v1252, 0.5
    %v1255 = vadd.f32 %v1253, 0.5
    %v1256 = vadd.f32 %v1254, 0.5
    %v1257 = vtanh.pop %v1153
    %v1258 = vtanh.pop %v1155
    %v1259 = vmul.f32 %v1235, 0.5
    %v1260 = vmul.f32 %v1237, 0.5
    %v1261 = vtanh.pop %v1259
    %v1262 = vtanh.pop %v1260
    %v1263 = vmul.f32 %v1261, 0.5
    %v1264 = vmul.f32 %v1262, 0.5
    %v1265 = vadd.f32 %v1263, 0.5
    %v1266 = vadd.f32 %v1264, 0.5
    %v1267 = vld [vmem:[%s2] sm:$0xff]
    %v1268 = vld [vmem:[%s2 + $0x8] sm:$0xff]
    %v1269 = vmul.f32 %v1267, %v1255
    %v1270 = vmul.f32 %v1268, %v1256
    %v1271 = vmul.f32 %v1247, %v1257
    %v1272 = vmul.f32 %v1248, %v1258
    %v1273 = vadd.f32 %v1269, %v1271
    %v1274 = vadd.f32 %v1270, %v1272
    %v1275 = vtanh.pop %v1273
    %v1276 = vtanh.pop %v1274
    %v1277 = vmul.f32 %v1265, %v1275
    %v1278 = vmul.f32 %v1266, %v1276
    %1279 = vst [vmem:[#allocation6] sm:$0xff] %v1273
    %1280 = vst [vmem:[#allocation6 + $0x8] sm:$0xff] %v1274
    %1281 = vst [vmem:[#allocation5] sm:$0xff] %v1277
    %1282 = vst [vmem:[#allocation5 + $0x8] sm:$0xff] %v1278
    // Predicated region
    $region18: #{lstm_cell_pallas.1} parent=1 // pred_check
      _
    $region19: #{lstm_cell_pallas.1} parent=1 // pred_check_branch
      %1284 = sbr.rel (0) target = $region21
    $region20: #{lstm_cell_pallas.1} parent=1 // pred_region
      %s1286 = ssub.s32 256, 256
      %1287 = vsyncadd [#allocation4], %s1286
      %s1289 = sshll.u32 [#allocation5], 4
      %s1290 = int_to_ptr.vmem [resolvable:$true] %s1289
      %1292 = dma.vmem_to_hbm [thread:$0]  %s1290, 256, %s3, [#allocation4]
    $region21: #{lstm_cell_pallas.1} parent=1 // pred_fallthru
      _
    // Predicated region
    $region22: #{lstm_cell_pallas.1} parent=1 // pred_check
      _
    $region23: #{lstm_cell_pallas.1} parent=1 // pred_check_branch
      %1294 = sbr.rel (0) target = $region25
    $region24: #{lstm_cell_pallas.1} parent=1 // pred_region
      %s1296 = ssub.s32 256, 256
      %1297 = vsyncadd [#allocation7], %s1296
      %s1299 = sshll.u32 [#allocation6], 4
      %s1300 = int_to_ptr.vmem [resolvable:$true] %s1299
      %1302 = dma.vmem_to_hbm [thread:$0]  %s1300, 256, %s4, [#allocation7]
    $region25: #{lstm_cell_pallas.1} parent=1 // pred_fallthru
      _
    // Predicated region
    $region26: #{lstm_cell_pallas.1} parent=1 // pred_check
      _
    $region27: #{lstm_cell_pallas.1} parent=1 // pred_check_branch
      %1304 = sbr.rel (0) target = $region29
    $region28: #{lstm_cell_pallas.1} parent=1 // pred_region
      %1305 = dma.done [#allocation4], 256
    $region29: #{lstm_cell_pallas.1} parent=1 // pred_fallthru
      _
    // Predicated region
    $region30: #{lstm_cell_pallas.1} parent=1 // pred_check
      _
    $region31: #{lstm_cell_pallas.1} parent=1 // pred_check_branch
      %1307 = sbr.rel (0) target = $region33
    $region32: #{lstm_cell_pallas.1} parent=1 // pred_region
      %1308 = dma.done [#allocation7], 256
    $region33: #{lstm_cell_pallas.1} parent=1 // pred_fallthru
      _
    %1309 = vsyncpa [#allocation3], 1
    %1310 = vsyncpa [#allocation4], 1
    %1311 = vsyncpa [#allocation7], 1

</llo_original>
